<compile_context>
chip_gen: v7x
topology: tpu7x:2x2x1
jax: 0.10.0
libtpu: 0.0.40
codegen_flags: <defaults>
</compile_context>

<pallas_src>
import jax
import jax.numpy as jnp
import numpy as np
from jax import lax
from jax.experimental import pallas as pl
from jax.experimental.pallas import tpu as pltpu

_MIB = 1024 * 1024
_SMALL_FALLBACK_ELEMS = 16 * 1024  # below this many output elems, XLA is faster


# ----------------------------------------------------------------------------
# VMEM budget / tile selection
# ----------------------------------------------------------------------------
def _vmem_capacity_bytes():
    try:
        return int(pltpu.get_tpu_info().vmem_capacity_bytes)
    except Exception:
        return 64 * _MIB  # conservative: v7x per-TensorCore capacity


def _choose_tiles(M, K, N, *, with_x, itemsize=4):
    """Pick (bm, bn, vmem_limit_bytes).

    bm: batch tile (sublane axis, multiple of 8 or == M)
    bn: token_dim tile (lane axis, multiple of 128 or == N); prefer bn == N so
        the (K, bn) basis tile is DMA'd once and stays VMEM-resident.
    """
    cap = _vmem_capacity_bytes()
    budget = min(cap // 2, 48 * _MIB)  # double-buffered tile working-set target

    def working_set(bm_, bn_):
        w = 2 * itemsize * (K * bn_ + bm_ * bn_)  # basis tile + out tile (x2 buffers)
        if with_x:
            w += 2 * itemsize * bm_ * K           # x tile (x2 buffers)
        return w

    bm = M if M <= 512 else 512
    bn = N
    while working_set(bm, bn) > budget:
        if bn > 128:
            bn = max(128, (bn // 2) // 128 * 128)
        elif bm > 8:
            bm = max(8, (bm // 2) // 8 * 8)
        else:
            # TODO(synk): add a K grid axis + f32 VMEM accumulator for huge
            # num_categories instead of keeping K whole.
            break

    # v7x has 2 TensorCores: make sure a "parallel" axis has >= 2 grid steps.
    if pl.cdiv(M, bm) * pl.cdiv(N, bn) == 1 and M >= 16:
        half = (((M + 1) // 2) + 7) // 8 * 8
        if half < M:
            bm = half

    vmem_limit = int(min(cap, max(32 * _MIB, 2 * working_set(bm, bn))))
    return bm, bn, vmem_limit


# ----------------------------------------------------------------------------
# Gather kernel (primary path): output rows are selected basis rows
# ----------------------------------------------------------------------------
def _gather_kernel(idx_ref, basis_ref, o_ref):
    """idx_ref: (M,) int32 in SMEM (scalar-prefetched category ids)
       basis_ref: (K, bn) resident VMEM slice of the basis
       o_ref: (bm, bn) output tile for the current batch tile."""
    i = pl.program_id(1)              # batch tile index (inner / fast grid axis)
    bm = o_ref.shape[0]
    m_total = idx_ref.shape[0]

    def copy_row(r, carry):
        # Clamp into range so the padded tail of a ragged last batch tile never
        # reads garbage indices (padded output rows are dropped at writeback).
        row = jnp.minimum(i * bm + r, m_total - 1)
        cat = idx_ref[row]
        o_ref[pl.ds(r, 1), :] = basis_ref[pl.ds(cat, 1), :]
        return carry

    lax.fori_loop(0, bm, copy_row, None, unroll=(bm <= 32))


def _gather_call(idx, ortho_basis):
    M = idx.shape[0]
    K, N = ortho_basis.shape
    itemsize = int(jnp.dtype(ortho_basis.dtype).itemsize)
    bm, bn, vmem_limit = _choose_tiles(M, K, N, with_x=False, itemsize=itemsize)
    grid = (pl.cdiv(N, bn), pl.cdiv(M, bm))  # token_dim outer -> basis resident

    cost = pl.CostEstimate(
        flops=0,
        transcendentals=0,
        bytes_accessed=itemsize * (K * N + M * N) + 4 * M,
    )

    return pl.pallas_call(
        _gather_kernel,
        out_shape=jax.ShapeDtypeStruct((M, N), ortho_basis.dtype),
        grid_spec=pltpu.PrefetchScalarGridSpec(
            num_scalar_prefetch=1,
            grid=grid,
            in_specs=[
                # constant block index across the inner batch sweep -> DMA'd once
                pl.BlockSpec((K, bn), lambda j, i, idx_s: (0, j)),
            ],
            out_specs=pl.BlockSpec((bm, bn), lambda j, i, idx_s: (i, j)),
        ),
        compiler_params=pltpu.CompilerParams(
            dimension_semantics=("parallel", "parallel"),
            vmem_limit_bytes=vmem_limit),
        cost_estimate=cost,
    )(idx, ortho_basis)


# ----------------------------------------------------------------------------
# Matmul kernel (general path, exact for arbitrary non-one-hot x)
# ----------------------------------------------------------------------------
def _matmul_kernel(x_ref, basis_ref, o_ref):
    """x_ref: (bm, K)   basis_ref: (K, bn)   o_ref: (bm, bn)."""
    o_ref[...] = jnp.dot(x_ref[...], basis_ref[...],
                         preferred_element_type=jnp.float32).astype(o_ref.dtype)


def _matmul_call(x, ortho_basis):
    M, K = x.shape
    K2, N = ortho_basis.shape
    assert K == K2, "x and ortho_basis contraction dims must match"
    out_dtype = jnp.result_type(x.dtype, ortho_basis.dtype)

    bm, bn, vmem_limit = _choose_tiles(M, K, N, with_x=True, itemsize=4)
    grid = (pl.cdiv(N, bn), pl.cdiv(M, bm))  # token_dim outer -> basis resident
    grid_n = grid[0]

    cost = pl.CostEstimate(
        flops=2 * M * N * K,
        transcendentals=0,
        # x is re-streamed once per token_dim tile; basis + output move once.
        bytes_accessed=4 * (M * K * grid_n + K * N + M * N),
    )

    return pl.pallas_call(
        _matmul_kernel,
        out_shape=jax.ShapeDtypeStruct((M, N), out_dtype),
        grid_spec=pltpu.PrefetchScalarGridSpec(
            num_scalar_prefetch=0,
            grid=grid,
            in_specs=[
                pl.BlockSpec((bm, K), lambda j, i: (i, 0)),  # batch tile of x
                pl.BlockSpec((K, bn), lambda j, i: (0, j)),  # resident basis tile
            ],
            out_specs=pl.BlockSpec((bm, bn), lambda j, i: (i, j)),
        ),
        compiler_params=pltpu.CompilerParams(
            dimension_semantics=("parallel", "parallel"),
            vmem_limit_bytes=vmem_limit),
        cost_estimate=cost,
    )(x, ortho_basis)


# ----------------------------------------------------------------------------
# Public forward
# ----------------------------------------------------------------------------
def orthogonal_embeddings_forward(x, ortho_basis, *, assume_one_hot=True,
                                  allow_xla_fallback=True):
    """OrthogonalEmbeddings.forward: x @ ortho_basis for one-hot x.

    x may be float one-hot rows (module semantics) or int32 category ids.
    assume_one_hot=True (module contract) uses the row-gather kernel (exact
    for one-hot x); assume_one_hot=False uses the exact matmul kernel and is
    valid for arbitrary x.  allow_xla_fallback dispatches tiny shapes to plain
    XLA where pallas_call dispatch overhead would dominate.
    """
    K, N = ortho_basis.shape

    if jnp.issubdtype(x.dtype, jnp.integer):
        idx = x.reshape(-1).astype(jnp.int32)
        M = idx.shape[0]
        if allow_xla_fallback and M * N <= _SMALL_FALLBACK_ELEMS:
            return jnp.take(ortho_basis, idx, axis=0)
        return _gather_call(idx, ortho_basis)

    M = x.shape[0]
    assert x.shape[1] == K, "x last dim must equal num_categories"
    if allow_xla_fallback and M * N <= _SMALL_FALLBACK_ELEMS:
        return jnp.dot(x, ortho_basis)
    if assume_one_hot:
        # One-hot row selection == gather; argmax recovers the category exactly.
        idx = jnp.argmax(x, axis=-1).astype(jnp.int32)
        return _gather_call(idx, ortho_basis)
    return _matmul_call(x, ortho_basis)


if __name__ == "__main__":
    # Small shapes consistent with the module: token_dim >= num_categories,
    # token_dim = 128 keeps the output lane-dense.
    BATCH, NUM_CAT, TOKEN_DIM = 16, 8, 128

    key = jax.random.PRNGKey(0)
    k_mat, k_cat = jax.random.split(key)

    # Parameter construction mirroring __init__ (host-side, not the kernel).
    random_mat = np.asarray(
        jax.random.normal(k_mat, (TOKEN_DIM, TOKEN_DIM), jnp.float32))
    u_mat, _, vh_mat = np.linalg.svd(random_mat)
    ortho_basis = jnp.asarray((u_mat @ vh_mat)[:NUM_CAT, :], dtype=jnp.float32)

    cats = jax.random.randint(k_cat, (BATCH,), 0, NUM_CAT)
    x = jax.nn.one_hot(cats, NUM_CAT, dtype=jnp.float32)

    ref = jnp.dot(x, ortho_basis)

    # 1) Default path: one-hot x -> index gather kernel (no MXU, no one-hot read).
    out_gather = jax.block_until_ready(
        orthogonal_embeddings_forward(x, ortho_basis, allow_xla_fallback=False))
    np.testing.assert_allclose(np.asarray(out_gather), np.asarray(ref),
                               rtol=1e-5, atol=1e-5)

    # 2) General path: exact matmul kernel (valid for arbitrary x).
    out_matmul = jax.block_until_ready(
        orthogonal_embeddings_forward(x, ortho_basis, assume_one_hot=False,
                                      allow_xla_fallback=False))
    np.testing.assert_allclose(np.asarray(out_matmul), np.asarray(ref),
                               rtol=1e-5, atol=1e-5)

    # 3) Callers that already hold integer category ids skip the one-hot entirely.
    out_idx = jax.block_until_ready(
        orthogonal_embeddings_forward(cats.astype(jnp.int32), ortho_basis,
                                      allow_xla_fallback=False))
    np.testing.assert_allclose(np.asarray(out_idx), np.asarray(ref),
                               rtol=1e-5, atol=1e-5)

    assert out_gather.shape == (BATCH, TOKEN_DIM)
    print("KERNEL_OK")
</pallas_src>

<mosaic_0001>
module attributes {stable_mosaic.version = 11 : i64} {
  func.func @_gather_kernel(%arg0: i32, %arg1: i32, %arg2: memref<16xi32, #tpu.memory_space<smem>>, %arg3: memref<8x128xf32, #tpu.memory_space<vmem>>, %arg4: memref<8x128xf32, #tpu.memory_space<vmem>>) attributes {dimension_semantics = [#tpu.dimension_semantics<parallel>, #tpu.dimension_semantics<parallel>], iteration_bounds = array<i64: 1, 2>, scalar_prefetch = 1 : i64, scratch_operands = 0 : i64, tpu.core_type = #tpu.core_type<tc>, window_params = [{transform_indices = @transform_0, window_bounds = array<i64: 8, 128>}, {transform_indices = @transform_1, window_bounds = array<i64: 8, 128>}]} {
    %c0_i32 = arith.constant 0 : i32
    %c8_i32 = arith.constant 8 : i32
    %0 = arith.muli %arg1, %c8_i32 : i32
    %1 = arith.addi %0, %c0_i32 : i32
    %c15_i32 = arith.constant 15 : i32
    %2 = arith.minsi %1, %c15_i32 : i32
    %3 = arith.index_cast %2 : i32 to index
    %4 = memref.load %arg2[%3] : memref<16xi32, #tpu.memory_space<smem>>
    %5 = arith.index_cast %4 : i32 to index
    %c0 = arith.constant 0 : index
    %6 = vector.load %arg3[%5, %c0] : memref<8x128xf32, #tpu.memory_space<vmem>>, vector<1x128xf32>
    %7 = arith.index_cast %c0_i32 : i32 to index
    %c0_0 = arith.constant 0 : index
    %8 = vector.load %arg4[%7, %c0_0] : memref<8x128xf32, #tpu.memory_space<vmem>>, vector<1x128xf32>
    tpu.vector_store %arg4[%7, %c0_0], %6 {strides = array<i32>} : memref<8x128xf32, #tpu.memory_space<vmem>>, vector<1x128xf32>,
    %c1_i32 = arith.constant 1 : i32
    %c8_i32_1 = arith.constant 8 : i32
    %9 = arith.muli %arg1, %c8_i32_1 : i32
    %10 = arith.addi %9, %c1_i32 : i32
    %c15_i32_2 = arith.constant 15 : i32
    %11 = arith.minsi %10, %c15_i32_2 : i32
    %12 = arith.index_cast %11 : i32 to index
    %13 = memref.load %arg2[%12] : memref<16xi32, #tpu.memory_space<smem>>
    %14 = arith.index_cast %13 : i32 to index
    %c0_3 = arith.constant 0 : index
    %15 = vector.load %arg3[%14, %c0_3] : memref<8x128xf32, #tpu.memory_space<vmem>>, vector<1x128xf32>
    %16 = arith.index_cast %c1_i32 : i32 to index
    %c0_4 = arith.constant 0 : index
    %17 = vector.load %arg4[%16, %c0_4] : memref<8x128xf32, #tpu.memory_space<vmem>>, vector<1x128xf32>
    tpu.vector_store %arg4[%16, %c0_4], %15 {strides = array<i32>} : memref<8x128xf32, #tpu.memory_space<vmem>>, vector<1x128xf32>,
    %c2_i32 = arith.constant 2 : i32
    %c8_i32_5 = arith.constant 8 : i32
    %18 = arith.muli %arg1, %c8_i32_5 : i32
    %19 = arith.addi %18, %c2_i32 : i32
    %c15_i32_6 = arith.constant 15 : i32
    %20 = arith.minsi %19, %c15_i32_6 : i32
    %21 = arith.index_cast %20 : i32 to index
    %22 = memref.load %arg2[%21] : memref<16xi32, #tpu.memory_space<smem>>
    %23 = arith.index_cast %22 : i32 to index
    %c0_7 = arith.constant 0 : index
    %24 = vector.load %arg3[%23, %c0_7] : memref<8x128xf32, #tpu.memory_space<vmem>>, vector<1x128xf32>
    %25 = arith.index_cast %c2_i32 : i32 to index
    %c0_8 = arith.constant 0 : index
    %26 = vector.load %arg4[%25, %c0_8] : memref<8x128xf32, #tpu.memory_space<vmem>>, vector<1x128xf32>
    tpu.vector_store %arg4[%25, %c0_8], %24 {strides = array<i32>} : memref<8x128xf32, #tpu.memory_space<vmem>>, vector<1x128xf32>,
    %c3_i32 = arith.constant 3 : i32
    %c8_i32_9 = arith.constant 8 : i32
    %27 = arith.muli %arg1, %c8_i32_9 : i32
    %28 = arith.addi %27, %c3_i32 : i32
    %c15_i32_10 = arith.constant 15 : i32
    %29 = arith.minsi %28, %c15_i32_10 : i32
    %30 = arith.index_cast %29 : i32 to index
    %31 = memref.load %arg2[%30] : memref<16xi32, #tpu.memory_space<smem>>
    %32 = arith.index_cast %31 : i32 to index
    %c0_11 = arith.constant 0 : index
    %33 = vector.load %arg3[%32, %c0_11] : memref<8x128xf32, #tpu.memory_space<vmem>>, vector<1x128xf32>
    %34 = arith.index_cast %c3_i32 : i32 to index
    %c0_12 = arith.constant 0 : index
    %35 = vector.load %arg4[%34, %c0_12] : memref<8x128xf32, #tpu.memory_space<vmem>>, vector<1x128xf32>
    tpu.vector_store %arg4[%34, %c0_12], %33 {strides = array<i32>} : memref<8x128xf32, #tpu.memory_space<vmem>>, vector<1x128xf32>,
    %c4_i32 = arith.constant 4 : i32
    %c8_i32_13 = arith.constant 8 : i32
    %36 = arith.muli %arg1, %c8_i32_13 : i32
    %37 = arith.addi %36, %c4_i32 : i32
    %c15_i32_14 = arith.constant 15 : i32
    %38 = arith.minsi %37, %c15_i32_14 : i32
    %39 = arith.index_cast %38 : i32 to index
    %40 = memref.load %arg2[%39] : memref<16xi32, #tpu.memory_space<smem>>
    %41 = arith.index_cast %40 : i32 to index
    %c0_15 = arith.constant 0 : index
    %42 = vector.load %arg3[%41, %c0_15] : memref<8x128xf32, #tpu.memory_space<vmem>>, vector<1x128xf32>
    %43 = arith.index_cast %c4_i32 : i32 to index
    %c0_16 = arith.constant 0 : index
    %44 = vector.load %arg4[%43, %c0_16] : memref<8x128xf32, #tpu.memory_space<vmem>>, vector<1x128xf32>
    tpu.vector_store %arg4[%43, %c0_16], %42 {strides = array<i32>} : memref<8x128xf32, #tpu.memory_space<vmem>>, vector<1x128xf32>,
    %c5_i32 = arith.constant 5 : i32
    %c8_i32_17 = arith.constant 8 : i32
    %45 = arith.muli %arg1, %c8_i32_17 : i32
    %46 = arith.addi %45, %c5_i32 : i32
    %c15_i32_18 = arith.constant 15 : i32
    %47 = arith.minsi %46, %c15_i32_18 : i32
    %48 = arith.index_cast %47 : i32 to index
    %49 = memref.load %arg2[%48] : memref<16xi32, #tpu.memory_space<smem>>
    %50 = arith.index_cast %49 : i32 to index
    %c0_19 = arith.constant 0 : index
    %51 = vector.load %arg3[%50, %c0_19] : memref<8x128xf32, #tpu.memory_space<vmem>>, vector<1x128xf32>
    %52 = arith.index_cast %c5_i32 : i32 to index
    %c0_20 = arith.constant 0 : index
    %53 = vector.load %arg4[%52, %c0_20] : memref<8x128xf32, #tpu.memory_space<vmem>>, vector<1x128xf32>
    tpu.vector_store %arg4[%52, %c0_20], %51 {strides = array<i32>} : memref<8x128xf32, #tpu.memory_space<vmem>>, vector<1x128xf32>,
    %c6_i32 = arith.constant 6 : i32
    %c8_i32_21 = arith.constant 8 : i32
    %54 = arith.muli %arg1, %c8_i32_21 : i32
    %55 = arith.addi %54, %c6_i32 : i32
    %c15_i32_22 = arith.constant 15 : i32
    %56 = arith.minsi %55, %c15_i32_22 : i32
    %57 = arith.index_cast %56 : i32 to index
    %58 = memref.load %arg2[%57] : memref<16xi32, #tpu.memory_space<smem>>
    %59 = arith.index_cast %58 : i32 to index
    %c0_23 = arith.constant 0 : index
    %60 = vector.load %arg3[%59, %c0_23] : memref<8x128xf32, #tpu.memory_space<vmem>>, vector<1x128xf32>
    %61 = arith.index_cast %c6_i32 : i32 to index
    %c0_24 = arith.constant 0 : index
    %62 = vector.load %arg4[%61, %c0_24] : memref<8x128xf32, #tpu.memory_space<vmem>>, vector<1x128xf32>
    tpu.vector_store %arg4[%61, %c0_24], %60 {strides = array<i32>} : memref<8x128xf32, #tpu.memory_space<vmem>>, vector<1x128xf32>,
    %c7_i32 = arith.constant 7 : i32
    %c8_i32_25 = arith.constant 8 : i32
    %63 = arith.muli %arg1, %c8_i32_25 : i32
    %64 = arith.addi %63, %c7_i32 : i32
    %c15_i32_26 = arith.constant 15 : i32
    %65 = arith.minsi %64, %c15_i32_26 : i32
    %66 = arith.index_cast %65 : i32 to index
    %67 = memref.load %arg2[%66] : memref<16xi32, #tpu.memory_space<smem>>
    %68 = arith.index_cast %67 : i32 to index
    %c0_27 = arith.constant 0 : index
    %69 = vector.load %arg3[%68, %c0_27] : memref<8x128xf32, #tpu.memory_space<vmem>>, vector<1x128xf32>
    %70 = arith.index_cast %c7_i32 : i32 to index
    %c0_28 = arith.constant 0 : index
    %71 = vector.load %arg4[%70, %c0_28] : memref<8x128xf32, #tpu.memory_space<vmem>>, vector<1x128xf32>
    tpu.vector_store %arg4[%70, %c0_28], %69 {strides = array<i32>} : memref<8x128xf32, #tpu.memory_space<vmem>>, vector<1x128xf32>,
    %c8_i32_29 = arith.constant 8 : i32
    return
  }
  func.func @transform_0(%arg0: i32, %arg1: i32, %arg2: memref<16xi32, #tpu.memory_space<smem>>) -> (i32, i32) {
    %c0_i32 = arith.constant 0 : i32
    %c0_i32_0 = arith.constant 0 : i32
    return %c0_i32, %arg0 : i32, i32
  }
  func.func @transform_1(%arg0: i32, %arg1: i32, %arg2: memref<16xi32, #tpu.memory_space<smem>>) -> (i32, i32) {
    %c0_i32 = arith.constant 0 : i32
    return %arg1, %arg0 : i32, i32
  }
}

</mosaic_0001>

<llo_original>
// kernel: tpu_custom_call.1
$region0: #{tpu_custom_call.1}
  #allocation0 [shape = 'u32[]', space=smem, size = 0x4, offset = 0x4, fixed_abs, tag = 'smem constant byte address 0x4 - core index']
  #allocation1 [shape = 'u32[144,128]{1,0:T(1,128)}', space=vmem, size = 0x12000, scoped, tag = 'internal scratch']
  #allocation2 [shape = 's32[1]{0}', space=sflag, size = 0x4, scoped, tag = 'scoped memory for tpu_custom_call.1']
  #allocation3 [shape = 'u8[512]{0}', space=smem, size = 0x200, scoped, tag = 'prefetched SMEM operand 0']
  %s0 = inlined_call_operand.hbm [shape: s32[16], index: 0, kind: input, shape index: {}]
  %s1 = inlined_call_operand.hbm [shape: f32[8,128], index: 1, kind: input, shape index: {}]
  %s2 = inlined_call_operand.hbm [shape: f32[16,128], index: 2, kind: output, shape index: {}]
  %s3 = sld [smem:[#allocation0]]
  $region41: #{tpu_custom_call.1} parent=0
    _
  %s5 = ssub.s32 1, %s3
  %s6 = scalar_select 0, %s5, %s3
  %8 = dma.hbm_to_smem %s0, 16, [#allocation3], [#allocation2]
  %9 = dma.done [#allocation2], 16
  %10 = sfence
  $region1: #{tpu_custom_call.1} parent=0
    #allocation4 [shape = 'u8[4096]{0}', space=vmem, size = 0x1000, scoped, tag = 'input window, operand 1, single buffered']
    #allocation5 [shape = 's32[2]{0}', space=sflag, size = 0x8, scoped, tag = 'scoped memory for tpu_custom_call.1']
    #allocation6 [shape = 's32[2]{0}', space=sflag, size = 0x8, scoped, tag = 'scoped memory for tpu_custom_call.1']
    #allocation7 [shape = 'u8[8192]{0}', space=vmem, size = 0x2000, scoped, tag = 'output window, operand 0']
    %11 = vsyncpa [#allocation5], 0
    %12 = vsyncpa [#allocation6], 0
    %s13 = scalar_lea.sflag [#allocation6], 1
    %14 = vsyncpa %s13, 0
    loop: start=0, step=1, limit=4
    $region2: #{tpu_custom_call.1} parent=1 // loop_pre_header
      _
    $region3: #{tpu_custom_call.1} parent=1 // loop_header
      %s16 = sphi 0, %s20
      %p17 = scmp.ge.s32.totalorder %s16, 4
      %s23 = sphi 0, %s35
      %s24 = sphi 0, %s31
      %s25 = sphi 0, %s23
      %s26 = sphi 0, %s24
      %s27 = sphi 0, %s25
      %s28 = sphi 0, %s26
      %s38 = sphi 0, %s40
      %s41 = sphi 0, %s38
      %s42 = sphi 0, %s41
      %s58 = sphi 0, %s42
      %s66 = sphi 0, %s68
      %s69 = sphi 0, %s66
      %s70 = sphi 0, %s69
      %s86 = sphi 0, %s70
    $region4: #{tpu_custom_call.1} parent=1 // loop_header_branch
      %19 = sbr.rel (%p17) target = $region8
    $region5: #{tpu_custom_call.1} parent=1 // loop_body
      %s21 = ssub.s32 %s16, 1
      %s22 = ssub.s32 %s16, 2
      %s29 = sadd.s32 1, %s24
      %p30 = scmp.ge.s32.totalorder %s29, 2
      %s31 = scalar_select %p30, 0, %s29
      %s32 = sadd.s32 1, %s23
      %s33 = scalar_select %p30, %s32, %s23
      %p34 = scmp.ge.s32.totalorder %s33, 1
      %s35 = scalar_select %p34, 0, %s33
      %s36 = ssub.s32 %s23, %s35
      %p37 = scmp.eq.s32.totalorder %s36, 0
      %s39 = sadd.s32 %s38, 1
      %s40 = scalar_select %p37, %s38, %s39
      %p43 = pneg %p37
      %p44 = scmp.eq.s32.totalorder %s16, 1
      %p45 = por %p43, %p44
      %p46 = scmp.ne.s32.totalorder %s38, %s41
      %p47 = scmp.eq.s32.totalorder %s16, 0
      %p48 = por %p46, %p47
      %p49 = scmp.ne.s32.totalorder %s38, %s41
      %p50 = scmp.eq.s32.totalorder %s21, 1
      %p51 = por %p49, %p50
      %p52 = scmp.ne.s32.totalorder %s41, %s42
      %p53 = scmp.eq.s32.totalorder %s21, 0
      %p54 = por %p52, %p53
      %p55 = scmp.ne.s32.totalorder %s41, %s42
      %p56 = scmp.eq.s32.totalorder %s22, 1
      %p57 = por %p55, %p56
      %p59 = scmp.ne.s32.totalorder %s42, %s58
      %p60 = scmp.eq.s32.totalorder %s22, 0
      %p61 = por %p59, %p60
      %s62 = ssub.s32 %s24, %s31
      %s63 = ssub.s32 %s23, %s35
      %s64 = sor.u32 %s62, %s63
      %p65 = scmp.eq.s32.totalorder %s64, 0
      %s67 = sadd.s32 %s66, 1
      %s68 = scalar_select %p65, %s66, %s67
      %p71 = pneg %p65
      %p72 = scmp.eq.s32.totalorder %s16, 1
      %p73 = por %p71, %p72
      %p74 = scmp.ne.s32.totalorder %s66, %s69
      %p75 = scmp.eq.s32.totalorder %s16, 0
      %p76 = por %p74, %p75
      %p77 = scmp.ne.s32.totalorder %s66, %s69
      %p78 = scmp.eq.s32.totalorder %s21, 1
      %p79 = por %p77, %p78
      %p80 = scmp.ne.s32.totalorder %s69, %s70
      %p81 = scmp.eq.s32.totalorder %s21, 0
      %p82 = por %p80, %p81
      %p83 = scmp.ne.s32.totalorder %s69, %s70
      %p84 = scmp.eq.s32.totalorder %s22, 1
      %p85 = por %p83, %p84
      %p87 = scmp.ne.s32.totalorder %s70, %s86
      %p88 = scmp.eq.s32.totalorder %s22, 0
      %p89 = por %p87, %p88
      %p90 = scmp.le.s32.totalorder 1, %s16
      %p91 = scmp.lt.s32.totalorder %s16, 3
      %p92 = pnand %p90, %p91
      %p93 = pneg %p92
      // Predicated region
      $region9: #{tpu_custom_call.1} parent=5 // pred_check
        _
      $region10: #{tpu_custom_call.1} parent=5 // pred_check_branch
        %95 = sbr.rel (%p92) target = $region12
      $region11: #{tpu_custom_call.1} parent=5 // pred_region
        %s96 = ssub.s32 %s16, 1
        // Predicated region
        $region13: #{tpu_custom_call.1} parent=11 // pred_check
          %p97 = pneg %p54
        $region14: #{tpu_custom_call.1} parent=11 // pred_check_branch
          %99 = sbr.rel (%p97) target = $region16
        $region15: #{tpu_custom_call.1} parent=11 // pred_region
          %s101 = ssub.s32 128, 128
          %102 = vsyncadd [#allocation5], %s101
          %s103 = smul.addr %s25, 128
          %s104 = scalar_lea.hbm %s1, %s103
          %s106 = sshll.u32 [#allocation4], 4
          %s107 = int_to_ptr.vmem [resolvable:$true] %s106
          %109 = dma.hbm_to_vmem [thread:$0]  %s104, 128, %s107, [#allocation5]
        $region16: #{tpu_custom_call.1} parent=11 // pred_fallthru
          _
      $region12: #{tpu_custom_call.1} parent=5 // pred_fallthru
        _
      %p110 = scmp.lt.s32.totalorder %s16, 2
      // Predicated region
      $region17: #{tpu_custom_call.1} parent=5 // pred_check
        %p111 = pneg %p110
      $region18: #{tpu_custom_call.1} parent=5 // pred_check_branch
        %113 = sbr.rel (%p111) target = $region20
      $region19: #{tpu_custom_call.1} parent=5 // pred_region
        _
      $region20: #{tpu_custom_call.1} parent=5 // pred_fallthru
        _
      %p114 = scmp.le.s32.totalorder 1, %s16
      %p115 = scmp.lt.s32.totalorder %s16, 3
      %p116 = pnand %p114, %p115
      %p117 = pneg %p116
      // Predicated region
      $region21: #{tpu_custom_call.1} parent=5 // pred_check
        _
      $region22: #{tpu_custom_call.1} parent=5 // pred_check_branch
        %119 = sbr.rel (%p116) target = $region24
      $region23: #{tpu_custom_call.1} parent=5 // pred_region
        %s120 = ssub.s32 %s16, 1
        // Predicated region
        $region25: #{tpu_custom_call.1} parent=23 // pred_check
          %p121 = pneg %p54
        $region26: #{tpu_custom_call.1} parent=23 // pred_check_branch
          %123 = sbr.rel (%p121) target = $region28
        $region27: #{tpu_custom_call.1} parent=23 // pred_region
          %124 = dma.done [#allocation5], 128
        $region28: #{tpu_custom_call.1} parent=23 // pred_fallthru
          _
        %p125 = pneg %p54
        %p126 = pneg %p51
        %p127 = pneg %p82
        %p128 = pneg %p79
        %s129 = sand.u32 %s69, 1
        %s130 = scalar_lea.sflag [#allocation6], %s129
        %s131 = sand.u32 %s69, 1
        %s132 = smul.addr %s131, 8
        %s133 = scalar_lea.vmem [#allocation7], %s132
        %s134 = smul.u32 %s26, 8
        %p135 = scmp.lt.s32.totalorder %s134, 15
        %s136 = scalar_select %p135, %s134, 15
        %s137 = sld [smem:[#allocation3 + %s136]]
        %s138 = scalar_lea.vmem [#allocation4], %s137
        %v139 = vld [vmem:[%s138] sm:$0x1]
        %140 = vst [vmem:[%s133] sm:$0x1] %v139
        %s141 = sadd.s32 %s134, 1
        %p142 = scmp.lt.s32.totalorder %s141, 15
        %s143 = scalar_select %p142, %s141, 15
        %s144 = sld [smem:[#allocation3 + %s143]]
        %s145 = scalar_lea.vmem [#allocation4], %s144
        %v146 = vld [vmem:[%s145] sm:$0x1]
        %147 = vst [vmem:[%s133 + $0x1] sm:$0x1] %v146
        %s148 = sadd.s32 %s134, 2
        %p149 = scmp.lt.s32.totalorder %s148, 15
        %s150 = scalar_select %p149, %s148, 15
        %s151 = sld [smem:[#allocation3 + %s150]]
        %s152 = scalar_lea.vmem [#allocation4], %s151
        %v153 = vld [vmem:[%s152] sm:$0x1]
        %154 = vst [vmem:[%s133 + $0x2] sm:$0x1] %v153
        %s155 = sadd.s32 %s134, 3
        %p156 = scmp.lt.s32.totalorder %s155, 15
        %s157 = scalar_select %p156, %s155, 15
        %s158 = sld [smem:[#allocation3 + %s157]]
        %s159 = scalar_lea.vmem [#allocation4], %s158
        %v160 = vld [vmem:[%s159] sm:$0x1]
        %161 = vst [vmem:[%s133 + $0x3] sm:$0x1] %v160
        %s162 = sadd.s32 %s134, 4
        %p163 = scmp.lt.s32.totalorder %s162, 15
        %s164 = scalar_select %p163, %s162, 15
        %s165 = sld [smem:[#allocation3 + %s164]]
        %s166 = scalar_lea.vmem [#allocation4], %s165
        %v167 = vld [vmem:[%s166] sm:$0x1]
        %168 = vst [vmem:[%s133 + $0x4] sm:$0x1] %v167
        %s169 = sadd.s32 %s134, 5
        %p170 = scmp.lt.s32.totalorder %s169, 15
        %s171 = scalar_select %p170, %s169, 15
        %s172 = sld [smem:[#allocation3 + %s171]]
        %s173 = scalar_lea.vmem [#allocation4], %s172
        %v174 = vld [vmem:[%s173] sm:$0x1]
        %175 = vst [vmem:[%s133 + $0x5] sm:$0x1] %v174
        %s176 = sadd.s32 %s134, 6
        %p177 = scmp.lt.s32.totalorder %s176, 15
        %s178 = scalar_select %p177, %s176, 15
        %s179 = sld [smem:[#allocation3 + %s178]]
        %s180 = scalar_lea.vmem [#allocation4], %s179
        %v181 = vld [vmem:[%s180] sm:$0x1]
        %182 = vst [vmem:[%s133 + $0x6] sm:$0x1] %v181
        %s183 = sadd.s32 %s134, 7
        %p184 = scmp.lt.s32.totalorder %s183, 15
        %s185 = scalar_select %p184, %s183, 15
        %s186 = sld [smem:[#allocation3 + %s185]]
        %s187 = scalar_lea.vmem [#allocation4], %s186
        %v188 = vld [vmem:[%s187] sm:$0x1]
        %189 = vst [vmem:[%s133 + $0x7] sm:$0x1] %v188
        %s190 = sand.u32 %s69, 1
        %s191 = scalar_lea.sflag [#allocation6], %s190
        %s192 = sand.u32 %s69, 1
        %s193 = smul.addr %s192, 8
        %s194 = scalar_lea.vmem [#allocation7], %s193
        // Predicated region
        $region29: #{tpu_custom_call.1} parent=23 // pred_check
          %p195 = pneg %p79
        $region30: #{tpu_custom_call.1} parent=23 // pred_check_branch
          %197 = sbr.rel (%p195) target = $region32
        $region31: #{tpu_custom_call.1} parent=23 // pred_region
          %s199 = ssub.s32 128, 128
          %200 = vsyncadd %s191, %s199
          %s201 = sadd.s32 %s25, %s26
          %s202 = smul.addr %s201, 128
          %s203 = scalar_lea.hbm %s2, %s202
          %s205 = sshll.u32 %s194, 4
          %s206 = int_to_ptr.vmem [resolvable:$true] %s205
          %208 = dma.vmem_to_hbm [thread:$0]  %s206, 128, %s203, %s191
        $region32: #{tpu_custom_call.1} parent=23 // pred_fallthru
          _
      $region24: #{tpu_custom_call.1} parent=5 // pred_fallthru
        _
      %p209 = scmp.le.s32.totalorder 2, %s16
      // Predicated region
      $region33: #{tpu_custom_call.1} parent=5 // pred_check
        %p210 = pneg %p209
      $region34: #{tpu_custom_call.1} parent=5 // pred_check_branch
        %212 = sbr.rel (%p210) target = $region36
      $region35: #{tpu_custom_call.1} parent=5 // pred_region
        %s213 = ssub.s32 %s16, 2
        // Predicated region
        $region37: #{tpu_custom_call.1} parent=35 // pred_check
          %p214 = pneg %p85
        $region38: #{tpu_custom_call.1} parent=35 // pred_check_branch
          %216 = sbr.rel (%p214) target = $region40
        $region39: #{tpu_custom_call.1} parent=35 // pred_region
          %s217 = sand.u32 %s70, 1
          %s218 = scalar_lea.sflag [#allocation6], %s217
          %s219 = sand.u32 %s70, 1
          %s220 = smul.addr %s219, 8
          %s221 = scalar_lea.vmem [#allocation7], %s220
          %222 = dma.done %s218, 128
        $region40: #{tpu_custom_call.1} parent=35 // pred_fallthru
          _
      $region36: #{tpu_custom_call.1} parent=5 // pred_fallthru
        _
    $region6: #{tpu_custom_call.1} parent=1 // loop_footer
      %s20 = sadd.s32 1, %s16
    $region7: #{tpu_custom_call.1} parent=1 // loop_footer_branch
      %15 = sbr.rel target = $region3
    $region8: #{tpu_custom_call.1} parent=1 // loop_exit
      _
    %223 = vsyncpa [#allocation5], 1
    %s224 = scalar_lea.sflag [#allocation5], 1
    %225 = vsyncpa %s224, 1
    %226 = vsyncpa [#allocation6], 1
    %s227 = scalar_lea.sflag [#allocation6], 1
    %228 = vsyncpa %s227, 1

</llo_original>
